<compile_context>
chip_gen: v7x
topology: tpu7x:2x2x1
jax: 0.10.0
libtpu: 0.0.40
codegen_flags: <defaults>
</compile_context>

<pallas_src>
import functools
import math

import jax
import jax.numpy as jnp
from jax.experimental import pallas as pl
from jax.experimental.pallas import tpu as pltpu

_LN_EPS = 1e-12


def _pick_vmem_limit():
    """Generation-aware scoped-VMEM budget (None -> compiler default)."""
    try:
        kind = jax.devices()[0].device_kind.lower()
    except Exception:
        return None
    if "v7" in kind:                       # 64 MiB physical per TC
        return 48 * 1024 * 1024
    if any(t in kind for t in ("v4", "v5", "v6")):   # 128 MiB physical
        return 96 * 1024 * 1024
    return None


_VMEM_LIMIT = _pick_vmem_limit()


def _fit_rows(dim, target, *, mult=16, want_parallel=2):
    """Sublane tile: multiple of 16 (bf16 packing), divides dim, and leaves
    >=2 blocks on the parallel M axis when possible (v7x: 2 TensorCores)."""
    if dim % mult:
        return dim
    cap = min(target, dim)
    if dim // cap < want_parallel and dim >= want_parallel * mult:
        cap = dim // want_parallel
    t = (cap // mult) * mult
    while t >= mult and dim % t:
        t -= mult
    return t if t >= mult and dim % t == 0 else dim


def _fit_lanes(dim, target):
    """Lane tile: prefer multiples of 256 (fill the 256-wide MXU on v6e/v7x),
    fall back to 128; must divide dim, else use the full dim."""
    if dim <= target:
        return dim
    for mult in (256, 128):
        t = (target // mult) * mult
        while t >= mult:
            if dim % t == 0:
                return t
            t -= mult
    return dim


def _erf(x):
    # Abramowitz & Stegun 7.1.26 (|err| < 1.5e-7): exact-erf GELU (HF BERT)
    # using only mul/add/exp, which always lower on Mosaic.
    p = 0.3275911
    a1, a2, a3, a4, a5 = (0.254829592, -0.284496736, 1.421413741,
                          -1.453152027, 1.061405429)
    sgn = jnp.where(x >= 0.0, 1.0, -1.0)
    ax = jnp.abs(x)
    t = 1.0 / (1.0 + p * ax)
    poly = ((((a5 * t + a4) * t + a3) * t + a2) * t + a1) * t
    return sgn * (1.0 - poly * jnp.exp(-ax * ax))


def _gelu_exact(x):
    return 0.5 * x * (1.0 + _erf(x * 0.7071067811865476))


# ----------------------------------------------------------------------------
# Kernel 1: fused attention block (per batch row):
#   qkv = x @ Wqkv + b ; multi-head softmax attention ; ctx @ Wo + bo + x ; LN
# qkv and ctx stay in VMEM; only the post-LN hidden is written back to HBM.
# ----------------------------------------------------------------------------
def _attn_block_kernel(x_ref, wqkv_ref, bqkv_ref, bias_ref, wo_ref, bo_ref,
                       g_ref, bb_ref, o_ref, ctx_ref, *, num_heads, eps):
    bblk, S, H = x_ref.shape
    dh = H // num_heads

    for b in range(bblk):                      # static (bblk is tiny)
        xb = x_ref[b]                          # (S, H) f32 (residual source)

        # Fused QKV projection: one contiguous (S, 3H) value, sliced statically.
        qkv = jnp.dot(xb.astype(jnp.bfloat16), wqkv_ref[...],
                      preferred_element_type=jnp.float32) + bqkv_ref[...]
        q = qkv[:, :H]                         # 1/sqrt(dh) folded into Wq
        k = qkv[:, H:2 * H]
        v = qkv[:, 2 * H:]
        bias = bias_ref[b]                     # (1, S) additive key mask

        # TODO(synk): for long sequences use a flash-style (q-tile, kv-tile)
        # online-softmax grid; dh=64 matmuls underfill the 256-wide MXU.
        for h in range(num_heads):
            sl = slice(h * dh, (h + 1) * dh)
            s = jax.lax.dot_general(
                q[:, sl].astype(jnp.bfloat16), k[:, sl].astype(jnp.bfloat16),
                (((1,), (1,)), ((), ())), preferred_element_type=jnp.float32)
            s = s + bias
            s_max = jnp.max(s, axis=-1, keepdims=True)
            e = jnp.exp(s - s_max)
            denom = jnp.sum(e, axis=-1, keepdims=True)
            p = e * pl.reciprocal(denom, approx=True)      # divide on the EUP
            ctx_h = jnp.dot(p.astype(jnp.bfloat16),
                            v[:, sl].astype(jnp.bfloat16),
                            preferred_element_type=jnp.float32)
            ctx_ref[:, sl] = ctx_h.astype(ctx_ref.dtype)   # 64-aligned slice store

        # Output projection + residual + LayerNorm (single K=H matmul).
        proj = jnp.dot(ctx_ref[...], wo_ref[...],
                       preferred_element_type=jnp.float32)
        hres = proj + bo_ref[...] + xb
        mu = jnp.mean(hres, axis=-1, keepdims=True)
        var = jnp.mean((hres - mu) ** 2, axis=-1, keepdims=True)
        y = (hres - mu) * jax.lax.rsqrt(var + eps) * g_ref[...] + bb_ref[...]
        o_ref[b] = y.astype(o_ref.dtype)


def attention_block(x, bias, wqkv, bqkv, wo, bo, gamma, beta, num_heads):
    B, S, H = x.shape
    bblk = 1                                   # grid=(B,) parallel -> both TCs busy
    return pl.pallas_call(
        functools.partial(_attn_block_kernel, num_heads=num_heads, eps=_LN_EPS),
        out_shape=jax.ShapeDtypeStruct((B, S, H), jnp.bfloat16),
        grid=(B // bblk,),
        in_specs=[
            pl.BlockSpec((bblk, S, H), lambda i: (i, 0, 0)),
            pl.BlockSpec((H, 3 * H), lambda i: (0, 0)),       # weights stay resident
            pl.BlockSpec((1, 3 * H), lambda i: (0, 0)),
            pl.BlockSpec((bblk, 1, S), lambda i: (i, 0, 0)),
            pl.BlockSpec((H, H), lambda i: (0, 0)),
            pl.BlockSpec((1, H), lambda i: (0, 0)),
            pl.BlockSpec((1, H), lambda i: (0, 0)),
            pl.BlockSpec((1, H), lambda i: (0, 0)),
        ],
        out_specs=pl.BlockSpec((bblk, S, H), lambda i: (i, 0, 0)),
        scratch_shapes=[pltpu.VMEM((S, H), jnp.bfloat16)],
        compiler_params=pltpu.CompilerParams(
            dimension_semantics=("parallel",),
            vmem_limit_bytes=_VMEM_LIMIT),
    )(x, wqkv, bqkv.reshape(1, 3 * H), bias, wo, bo.reshape(1, H),
      gamma.reshape(1, H), beta.reshape(1, H))


# ----------------------------------------------------------------------------
# Kernel 2: fused FFN  LN( gelu(h @ W1 + b1) @ W2 + b2 + h )
#           FF intermediate (tm, tf) never leaves VMEM; finalizes in f32.
# ----------------------------------------------------------------------------
def _ffn_ln_kernel(h_ref, w1_ref, b1_ref, w2_ref, b2_ref, g_ref, bb_ref,
                   o_ref, acc_ref, *, eps):
    f = pl.program_id(1)

    @pl.when(f == 0)
    def _():
        acc_ref[...] = jnp.zeros_like(acc_ref)

    t = jnp.dot(h_ref[...], w1_ref[...],
                preferred_element_type=jnp.float32) + b1_ref[...]
    t = _gelu_exact(t)
    acc_ref[...] += jnp.dot(t.astype(w2_ref.dtype), w2_ref[...],
                            preferred_element_type=jnp.float32)

    @pl.when(f == pl.num_programs(1) - 1)
    def _():
        h = acc_ref[...] + b2_ref[...] + h_ref[...].astype(jnp.float32)
        mu = jnp.mean(h, axis=-1, keepdims=True)
        var = jnp.mean((h - mu) ** 2, axis=-1, keepdims=True)
        y = (h - mu) * jax.lax.rsqrt(var + eps) * g_ref[...] + bb_ref[...]
        o_ref[...] = y.astype(o_ref.dtype)


def ffn_add_layernorm(h, w1, b1, w2, b2, gamma, beta, *, tm=256, tf=512):
    M, H = h.shape
    _, FF = w1.shape
    tm = _fit_rows(M, tm)        # 16-multiple, >=2 parallel blocks when possible
    tf = _fit_lanes(FF, tf)      # 256-multiple preferred (MXU occupancy)
    return pl.pallas_call(
        functools.partial(_ffn_ln_kernel, eps=_LN_EPS),
        out_shape=jax.ShapeDtypeStruct((M, H), jnp.float32),   # f32 for pooling parity
        grid=(M // tm, FF // tf),
        in_specs=[
            pl.BlockSpec((tm, H), lambda i, f: (i, 0)),
            pl.BlockSpec((H, tf), lambda i, f: (0, f)),
            pl.BlockSpec((1, tf), lambda i, f: (0, f)),
            pl.BlockSpec((tf, H), lambda i, f: (f, 0)),
            pl.BlockSpec((1, H), lambda i, f: (0, 0)),
            pl.BlockSpec((1, H), lambda i, f: (0, 0)),
            pl.BlockSpec((1, H), lambda i, f: (0, 0)),
        ],
        out_specs=pl.BlockSpec((tm, H), lambda i, f: (i, 0)),
        scratch_shapes=[pltpu.VMEM((tm, H), jnp.float32)],
        compiler_params=pltpu.CompilerParams(
            dimension_semantics=("parallel", "arbitrary"),
            vmem_limit_bytes=_VMEM_LIMIT),
    )(h, w1, b1.reshape(1, FF), w2, b2.reshape(1, H),
      gamma.reshape(1, H), beta.reshape(1, H))


# ----------------------------------------------------------------------------
# Kernel 3: Pooler('avg') — masked mean over the sequence.
# Mask arrives as (B, 1, S): S lane-dense.  num = mask @ hidden (one matvec).
# Exact divide (denominator is a single scalar per row).
# ----------------------------------------------------------------------------
def _avg_pool_kernel(h_ref, m_ref, o_ref):
    h = h_ref[0]                                              # (S, H) f32
    m = m_ref[0]                                              # (1, S) f32
    num = jnp.dot(m, h, preferred_element_type=jnp.float32)   # (1, H)
    den = jnp.maximum(jnp.sum(m, axis=-1, keepdims=True), 1.0)
    o_ref[0] = num / den


def avg_pool(last_hidden, attention_mask):
    B, S, H = last_hidden.shape
    mask_f = attention_mask.astype(jnp.float32).reshape(B, 1, S)
    out = pl.pallas_call(
        _avg_pool_kernel,
        out_shape=jax.ShapeDtypeStruct((B, 1, H), jnp.float32),
        grid=(B,),
        in_specs=[
            pl.BlockSpec((1, S, H), lambda b: (b, 0, 0)),
            pl.BlockSpec((1, 1, S), lambda b: (b, 0, 0)),
        ],
        out_specs=pl.BlockSpec((1, 1, H), lambda b: (b, 0, 0)),
        compiler_params=pltpu.CompilerParams(
            dimension_semantics=("parallel",),
            vmem_limit_bytes=_VMEM_LIMIT),
    )(last_hidden, mask_f)
    return out.reshape(B, H)


# ----------------------------------------------------------------------------
# Model glue (free row-major reshapes only — no HBM transposes)
# ----------------------------------------------------------------------------
def encoder_layer(x, attention_mask, p, num_heads):
    B, S, H = x.shape
    # Additive key mask; scores are accumulated in f32, so -1e9 is safe.
    bias = ((1.0 - attention_mask.astype(jnp.float32)) * -1e9).reshape(B, 1, S)

    # Fused QKV + attention + output projection + residual + LN.
    h1 = attention_block(x.astype(jnp.float32), bias,
                         p["w_qkv"], p["b_qkv"], p["wo"], p["bo"],
                         p["ln1_g"], p["ln1_b"], num_heads)       # (B,S,H) bf16

    # Fused FFN + residual + LN (f32 output for exact pooling).
    # TODO(synk): for tiny B*S the avg-pool could also be folded into this
    # kernel's finalize; kept separate so it stays correct for any tm/S split.
    h2 = ffn_add_layernorm(h1.reshape(B * S, H),
                           p["w1"], p["b1"], p["w2"], p["b2"],
                           p["ln2_g"], p["ln2_b"])                # (B*S,H) f32
    return h2.reshape(B, S, H)


def autoencoder_forward(token_embeddings, attention_mask, params, num_heads):
    """Equivalent of AutoEncoder.forward with pooling type 'avg'."""
    # TODO(synk): tokenizer + pretrained BERT checkpoint are not loadable here;
    # backbone is a single deterministic-weight transformer encoder layer.
    last_hidden = encoder_layer(token_embeddings, attention_mask, params, num_heads)
    return avg_pool(last_hidden, attention_mask)


def init_params(key, H, FF, num_heads):
    ks = jax.random.split(key, 6)
    n = lambda k, shape: 0.02 * jax.random.normal(k, shape, jnp.float32)
    wq, wk, wv = n(ks[0], (H, H)), n(ks[1], (H, H)), n(ks[2], (H, H))
    bq = bk = bv = jnp.zeros((H,), jnp.float32)
    scale = 1.0 / math.sqrt(H // num_heads)
    # Fold 1/sqrt(dh) into the Q projection; fuse Q|K|V into one weight.
    w_qkv = jnp.concatenate([wq * scale, wk, wv], axis=1)      # (H, 3H)
    b_qkv = jnp.concatenate([bq * scale, bk, bv], axis=0)      # (3H,)
    bf = lambda a: a.astype(jnp.bfloat16)
    return {
        "w_qkv": bf(w_qkv), "b_qkv": b_qkv,
        "wo": bf(n(ks[3], (H, H))), "bo": jnp.zeros((H,), jnp.float32),
        "ln1_g": jnp.ones((H,), jnp.float32), "ln1_b": jnp.zeros((H,), jnp.float32),
        "w1": bf(n(ks[4], (H, FF))), "b1": jnp.zeros((FF,), jnp.float32),
        "w2": bf(n(ks[5], (FF, H))), "b2": jnp.zeros((H,), jnp.float32),
        "ln2_g": jnp.ones((H,), jnp.float32), "ln2_b": jnp.zeros((H,), jnp.float32),
    }


if __name__ == "__main__":
    # Small but lane-dense shapes: H = 128 (2 heads x 64), FF = 4H = 512.
    B, S, H, NH, FF = 2, 16, 128, 2, 512

    key = jax.random.PRNGKey(0)
    k_emb, k_par = jax.random.split(key)

    # Synthetic token embeddings (stand-in for tokenizer + embedding lookup)
    # and a padded attention mask, as the HF tokenizer would emit.
    x = jax.random.normal(k_emb, (B, S, H), jnp.float32)
    lengths = jnp.array([12, 6], dtype=jnp.int32)
    attention_mask = (jnp.arange(S)[None, :] < lengths[:, None]).astype(jnp.int32)

    params = init_params(k_par, H, FF, NH)

    out = autoencoder_forward(x, attention_mask, params, NH)   # (B, H)
    jax.block_until_ready(out)

    assert out.shape == (B, H) and out.dtype == jnp.float32
    assert bool(jnp.all(jnp.isfinite(out)))
    print("KERNEL_OK")
</pallas_src>

<mosaic_0001>
module attributes {stable_mosaic.version = 11 : i64} {
  func.func @_attn_block_kernel(%arg0: i32, %arg1: memref<1x16x128xf32, #tpu.memory_space<vmem>>, %arg2: memref<128x384xbf16, #tpu.memory_space<vmem>>, %arg3: memref<1x384xf32, #tpu.memory_space<vmem>>, %arg4: memref<1x1x16xf32, #tpu.memory_space<vmem>>, %arg5: memref<128x128xbf16, #tpu.memory_space<vmem>>, %arg6: memref<1x128xf32, #tpu.memory_space<vmem>>, %arg7: memref<1x128xf32, #tpu.memory_space<vmem>>, %arg8: memref<1x128xf32, #tpu.memory_space<vmem>>, %arg9: memref<1x16x128xbf16, #tpu.memory_space<vmem>>, %arg10: memref<16x128xbf16, #tpu.memory_space<vmem>>) attributes {dimension_semantics = [#tpu.dimension_semantics<parallel>], iteration_bounds = array<i64: 2>, scalar_prefetch = 0 : i64, scratch_operands = 1 : i64, tpu.core_type = #tpu.core_type<tc>, window_params = [{transform_indices = @transform_0, window_bounds = array<i64: 1, 16, 128>}, {pipeline_mode = #tpu.pipeline_mode<synchronous>, transform_indices = @transform_1, window_bounds = array<i64: 128, 384>}, {pipeline_mode = #tpu.pipeline_mode<synchronous>, transform_indices = @transform_2, window_bounds = array<i64: 1, 384>}, {transform_indices = @transform_3, window_bounds = array<i64: 1, 1, 16>}, {pipeline_mode = #tpu.pipeline_mode<synchronous>, transform_indices = @transform_4, window_bounds = array<i64: 128, 128>}, {pipeline_mode = #tpu.pipeline_mode<synchronous>, transform_indices = @transform_5, window_bounds = array<i64: 1, 128>}, {pipeline_mode = #tpu.pipeline_mode<synchronous>, transform_indices = @transform_6, window_bounds = array<i64: 1, 128>}, {pipeline_mode = #tpu.pipeline_mode<synchronous>, transform_indices = @transform_7, window_bounds = array<i64: 1, 128>}, {transform_indices = @transform_8, window_bounds = array<i64: 1, 16, 128>}]} {
    %c0 = arith.constant 0 : index
    %c0_0 = arith.constant 0 : index
    %c0_1 = arith.constant 0 : index
    %0 = vector.load %arg1[%c0, %c0_0, %c0_1] : memref<1x16x128xf32, #tpu.memory_space<vmem>>, vector<1x16x128xf32>
    %1 = vector.shape_cast %0 : vector<1x16x128xf32> to vector<16x128xf32>
    %2 = arith.truncf %1 : vector<16x128xf32> to vector<16x128xbf16>
    %c0_2 = arith.constant 0 : index
    %c0_3 = arith.constant 0 : index
    %3 = vector.load %arg2[%c0_2, %c0_3] : memref<128x384xbf16, #tpu.memory_space<vmem>>, vector<128x384xbf16>
    %cst = arith.constant dense<0.000000e+00> : vector<16x384xf32>
    %4 = tpu.matmul %2, %3, %cst {dimension_numbers = #tpu.dot_dimension_numbers<[1], [0], [0], [1], [0, 0, 1, 1], [], []>} : vector<16x128xbf16>, vector<128x384xbf16>, vector<16x384xf32> -> vector<16x384xf32>
    %c0_4 = arith.constant 0 : index
    %c0_5 = arith.constant 0 : index
    %5 = vector.load %arg3[%c0_4, %c0_5] : memref<1x384xf32, #tpu.memory_space<vmem>>, vector<1x384xf32>
    %6 = vector.broadcast %5 : vector<1x384xf32> to vector<16x384xf32>
    %7 = arith.addf %4, %6 : vector<16x384xf32>
    %8 = vector.extract_strided_slice %7 {offsets = [0, 0], sizes = [16, 128], strides = [1, 1]} : vector<16x384xf32> to vector<16x128xf32>
    %9 = vector.extract_strided_slice %7 {offsets = [0, 128], sizes = [16, 128], strides = [1, 1]} : vector<16x384xf32> to vector<16x128xf32>
    %10 = vector.extract_strided_slice %7 {offsets = [0, 256], sizes = [16, 128], strides = [1, 1]} : vector<16x384xf32> to vector<16x128xf32>
    %c0_6 = arith.constant 0 : index
    %c0_7 = arith.constant 0 : index
    %c0_8 = arith.constant 0 : index
    %11 = vector.load %arg4[%c0_6, %c0_7, %c0_8] : memref<1x1x16xf32, #tpu.memory_space<vmem>>, vector<1x1x16xf32>
    %12 = vector.shape_cast %11 : vector<1x1x16xf32> to vector<1x16xf32>
    %13 = vector.extract_strided_slice %8 {offsets = [0, 0], sizes = [16, 64], strides = [1, 1]} : vector<16x128xf32> to vector<16x64xf32>
    %14 = arith.truncf %13 : vector<16x64xf32> to vector<16x64xbf16>
    %15 = vector.extract_strided_slice %9 {offsets = [0, 0], sizes = [16, 64], strides = [1, 1]} : vector<16x128xf32> to vector<16x64xf32>
    %16 = arith.truncf %15 : vector<16x64xf32> to vector<16x64xbf16>
    %cst_9 = arith.constant dense<0.000000e+00> : vector<16x16xf32>
    %17 = tpu.matmul %14, %16, %cst_9 {dimension_numbers = #tpu.dot_dimension_numbers<[1], [1], [0], [0], [0, 0, 1, 0], [], []>} : vector<16x64xbf16>, vector<16x64xbf16>, vector<16x16xf32> -> vector<16x16xf32>
    %18 = vector.broadcast %12 : vector<1x16xf32> to vector<16x16xf32>
    %19 = arith.addf %17, %18 : vector<16x16xf32>
    %cst_10 = arith.constant dense<0xFF800000> : vector<16xf32>
    %20 = vector.multi_reduction <maximumf>, %19, %cst_10 [1] : vector<16x16xf32> to vector<16xf32>
    %21 = vector.shape_cast %20 : vector<16xf32> to vector<16x1xf32>
    %22 = vector.broadcast %21 : vector<16x1xf32> to vector<16x16xf32>
    %23 = arith.subf %19, %22 : vector<16x16xf32>
    %24 = math.exp %23 : vector<16x16xf32>
    %cst_11 = arith.constant dense<0.000000e+00> : vector<16xf32>
    %25 = vector.multi_reduction <add>, %24, %cst_11 [1] : vector<16x16xf32> to vector<16xf32>
    %26 = vector.shape_cast %25 : vector<16xf32> to vector<16x1xf32>
    %27 = tpu.reciprocal %26 {approx = true} : vector<16x1xf32> -> vector<16x1xf32>
    %28 = vector.broadcast %27 : vector<16x1xf32> to vector<16x16xf32>
    %29 = arith.mulf %24, %28 : vector<16x16xf32>
    %30 = arith.truncf %29 : vector<16x16xf32> to vector<16x16xbf16>
    %31 = vector.extract_strided_slice %10 {offsets = [0, 0], sizes = [16, 64], strides = [1, 1]} : vector<16x128xf32> to vector<16x64xf32>
    %32 = arith.truncf %31 : vector<16x64xf32> to vector<16x64xbf16>
    %cst_12 = arith.constant dense<0.000000e+00> : vector<16x64xf32>
    %33 = tpu.matmul %30, %32, %cst_12 {dimension_numbers = #tpu.dot_dimension_numbers<[1], [0], [0], [1], [0, 0, 1, 1], [], []>} : vector<16x16xbf16>, vector<16x64xbf16>, vector<16x64xf32> -> vector<16x64xf32>
    %34 = arith.truncf %33 : vector<16x64xf32> to vector<16x64xbf16>
    %c0_13 = arith.constant 0 : index
    %c0_14 = arith.constant 0 : index
    %35 = vector.load %arg10[%c0_13, %c0_14] : memref<16x128xbf16, #tpu.memory_space<vmem>>, vector<16x64xbf16>
    tpu.vector_store %arg10[%c0_13, %c0_14], %34 {strides = array<i32>} : memref<16x128xbf16, #tpu.memory_space<vmem>>, vector<16x64xbf16>,
    %36 = vector.extract_strided_slice %8 {offsets = [0, 64], sizes = [16, 64], strides = [1, 1]} : vector<16x128xf32> to vector<16x64xf32>
    %37 = arith.truncf %36 : vector<16x64xf32> to vector<16x64xbf16>
    %38 = vector.extract_strided_slice %9 {offsets = [0, 64], sizes = [16, 64], strides = [1, 1]} : vector<16x128xf32> to vector<16x64xf32>
    %39 = arith.truncf %38 : vector<16x64xf32> to vector<16x64xbf16>
    %cst_15 = arith.constant dense<0.000000e+00> : vector<16x16xf32>
    %40 = tpu.matmul %37, %39, %cst_15 {dimension_numbers = #tpu.dot_dimension_numbers<[1], [1], [0], [0], [0, 0, 1, 0], [], []>} : vector<16x64xbf16>, vector<16x64xbf16>, vector<16x16xf32> -> vector<16x16xf32>
    %41 = vector.broadcast %12 : vector<1x16xf32> to vector<16x16xf32>
    %42 = arith.addf %40, %41 : vector<16x16xf32>
    %cst_16 = arith.constant dense<0xFF800000> : vector<16xf32>
    %43 = vector.multi_reduction <maximumf>, %42, %cst_16 [1] : vector<16x16xf32> to vector<16xf32>
    %44 = vector.shape_cast %43 : vector<16xf32> to vector<16x1xf32>
    %45 = vector.broadcast %44 : vector<16x1xf32> to vector<16x16xf32>
    %46 = arith.subf %42, %45 : vector<16x16xf32>
    %47 = math.exp %46 : vector<16x16xf32>
    %cst_17 = arith.constant dense<0.000000e+00> : vector<16xf32>
    %48 = vector.multi_reduction <add>, %47, %cst_17 [1] : vector<16x16xf32> to vector<16xf32>
    %49 = vector.shape_cast %48 : vector<16xf32> to vector<16x1xf32>
    %50 = tpu.reciprocal %49 {approx = true} : vector<16x1xf32> -> vector<16x1xf32>
    %51 = vector.broadcast %50 : vector<16x1xf32> to vector<16x16xf32>
    %52 = arith.mulf %47, %51 : vector<16x16xf32>
    %53 = arith.truncf %52 : vector<16x16xf32> to vector<16x16xbf16>
    %54 = vector.extract_strided_slice %10 {offsets = [0, 64], sizes = [16, 64], strides = [1, 1]} : vector<16x128xf32> to vector<16x64xf32>
    %55 = arith.truncf %54 : vector<16x64xf32> to vector<16x64xbf16>
    %cst_18 = arith.constant dense<0.000000e+00> : vector<16x64xf32>
    %56 = tpu.matmul %53, %55, %cst_18 {dimension_numbers = #tpu.dot_dimension_numbers<[1], [0], [0], [1], [0, 0, 1, 1], [], []>} : vector<16x16xbf16>, vector<16x64xbf16>, vector<16x64xf32> -> vector<16x64xf32>
    %57 = arith.truncf %56 : vector<16x64xf32> to vector<16x64xbf16>
    %c0_19 = arith.constant 0 : index
    %c64 = arith.constant 64 : index
    %58 = vector.load %arg10[%c0_19, %c64] : memref<16x128xbf16, #tpu.memory_space<vmem>>, vector<16x64xbf16>
    tpu.vector_store %arg10[%c0_19, %c64], %57 {strides = array<i32>} : memref<16x128xbf16, #tpu.memory_space<vmem>>, vector<16x64xbf16>,
    %c0_20 = arith.constant 0 : index
    %c0_21 = arith.constant 0 : index
    %59 = vector.load %arg10[%c0_20, %c0_21] : memref<16x128xbf16, #tpu.memory_space<vmem>>, vector<16x128xbf16>
    %c0_22 = arith.constant 0 : index
    %c0_23 = arith.constant 0 : index
    %60 = vector.load %arg5[%c0_22, %c0_23] : memref<128x128xbf16, #tpu.memory_space<vmem>>, vector<128x128xbf16>
    %cst_24 = arith.constant dense<0.000000e+00> : vector<16x128xf32>
    %61 = tpu.matmul %59, %60, %cst_24 {dimension_numbers = #tpu.dot_dimension_numbers<[1], [0], [0], [1], [0, 0, 1, 1], [], []>} : vector<16x128xbf16>, vector<128x128xbf16>, vector<16x128xf32> -> vector<16x128xf32>
    %c0_25 = arith.constant 0 : index
    %c0_26 = arith.constant 0 : index
    %62 = vector.load %arg6[%c0_25, %c0_26] : memref<1x128xf32, #tpu.memory_space<vmem>>, vector<1x128xf32>
    %63 = vector.broadcast %62 : vector<1x128xf32> to vector<16x128xf32>
    %64 = arith.addf %61, %63 : vector<16x128xf32>
    %65 = arith.addf %64, %1 : vector<16x128xf32>
    %cst_27 = arith.constant dense<0.000000e+00> : vector<16xf32>
    %66 = vector.multi_reduction <add>, %65, %cst_27 [1] : vector<16x128xf32> to vector<16xf32>
    %67 = vector.shape_cast %66 : vector<16xf32> to vector<16x1xf32>
    %cst_28 = arith.constant 1.280000e+02 : f32
    %68 = vector.broadcast %cst_28 : f32 to vector<16x1xf32>
    %69 = arith.divf %67, %68 : vector<16x1xf32>
    %70 = vector.broadcast %69 : vector<16x1xf32> to vector<16x128xf32>
    %71 = arith.subf %65, %70 : vector<16x128xf32>
    %72 = arith.mulf %71, %71 : vector<16x128xf32>
    %cst_29 = arith.constant dense<0.000000e+00> : vector<16xf32>
    %73 = vector.multi_reduction <add>, %72, %cst_29 [1] : vector<16x128xf32> to vector<16xf32>
    %74 = vector.shape_cast %73 : vector<16xf32> to vector<16x1xf32>
    %cst_30 = arith.constant 1.280000e+02 : f32
    %75 = vector.broadcast %cst_30 : f32 to vector<16x1xf32>
    %76 = arith.divf %74, %75 : vector<16x1xf32>
    %77 = vector.broadcast %69 : vector<16x1xf32> to vector<16x128xf32>
    %78 = arith.subf %65, %77 : vector<16x128xf32>
    %cst_31 = arith.constant 9.99999996E-13 : f32
    %79 = vector.broadcast %cst_31 : f32 to vector<16x1xf32>
    %80 = arith.addf %76, %79 : vector<16x1xf32>
    %81 = math.rsqrt %80 : vector<16x1xf32>
    %82 = vector.broadcast %81 : vector<16x1xf32> to vector<16x128xf32>
    %83 = arith.mulf %78, %82 : vector<16x128xf32>
    %c0_32 = arith.constant 0 : index
    %c0_33 = arith.constant 0 : index
    %84 = vector.load %arg7[%c0_32, %c0_33] : memref<1x128xf32, #tpu.memory_space<vmem>>, vector<1x128xf32>
    %85 = vector.broadcast %84 : vector<1x128xf32> to vector<16x128xf32>
    %86 = arith.mulf %83, %85 : vector<16x128xf32>
    %c0_34 = arith.constant 0 : index
    %c0_35 = arith.constant 0 : index
    %87 = vector.load %arg8[%c0_34, %c0_35] : memref<1x128xf32, #tpu.memory_space<vmem>>, vector<1x128xf32>
    %88 = vector.broadcast %87 : vector<1x128xf32> to vector<16x128xf32>
    %89 = arith.addf %86, %88 : vector<16x128xf32>
    %90 = arith.truncf %89 : vector<16x128xf32> to vector<16x128xbf16>
    %c0_36 = arith.constant 0 : index
    %c0_37 = arith.constant 0 : index
    %c0_38 = arith.constant 0 : index
    %91 = vector.load %arg9[%c0_36, %c0_37, %c0_38] : memref<1x16x128xbf16, #tpu.memory_space<vmem>>, vector<1x16x128xbf16>
    %92 = vector.shape_cast %91 : vector<1x16x128xbf16> to vector<16x128xbf16>
    %93 = vector.shape_cast %90 : vector<16x128xbf16> to vector<1x16x128xbf16>
    tpu.vector_store %arg9[%c0_36, %c0_37, %c0_38], %93 {strides = array<i32>} : memref<1x16x128xbf16, #tpu.memory_space<vmem>>, vector<1x16x128xbf16>,
    return
  }
  func.func @transform_0(%arg0: i32) -> (i32, i32, i32) {
    %c0_i32 = arith.constant 0 : i32
    %c0_i32_0 = arith.constant 0 : i32
    %c0_i32_1 = arith.constant 0 : i32
    return %arg0, %c0_i32, %c0_i32_0 : i32, i32, i32
  }
  func.func @transform_1(%arg0: i32) -> (i32, i32) {
    %c0_i32 = arith.constant 0 : i32
    %c0_i32_0 = arith.constant 0 : i32
    %c0_i32_1 = arith.constant 0 : i32
    return %c0_i32, %c0_i32_0 : i32, i32
  }
  func.func @transform_2(%arg0: i32) -> (i32, i32) {
    %c0_i32 = arith.constant 0 : i32
    %c0_i32_0 = arith.constant 0 : i32
    %c0_i32_1 = arith.constant 0 : i32
    return %c0_i32, %c0_i32_0 : i32, i32
  }
  func.func @transform_3(%arg0: i32) -> (i32, i32, i32) {
    %c0_i32 = arith.constant 0 : i32
    %c0_i32_0 = arith.constant 0 : i32
    %c0_i32_1 = arith.constant 0 : i32
    return %arg0, %c0_i32, %c0_i32_0 : i32, i32, i32
  }
  func.func @transform_4(%arg0: i32) -> (i32, i32) {
    %c0_i32 = arith.constant 0 : i32
    %c0_i32_0 = arith.constant 0 : i32
    %c0_i32_1 = arith.constant 0 : i32
    return %c0_i32, %c0_i32_0 : i32, i32
  }
  func.func @transform_5(%arg0: i32) -> (i32, i32) {
    %c0_i32 = arith.constant 0 : i32
    %c0_i32_0 = arith.constant 0 : i32
    %c0_i32_1 = arith.constant 0 : i32
    return %c0_i32, %c0_i32_0 : i32, i32
  }
  func.func @transform_6(%arg0: i32) -> (i32, i32) {
    %c0_i32 = arith.constant 0 : i32
    %c0_i32_0 = arith.constant 0 : i32
    %c0_i32_1 = arith.constant 0 : i32
    return %c0_i32, %c0_i32_0 : i32, i32
  }
  func.func @transform_7(%arg0: i32) -> (i32, i32) {
    %c0_i32 = arith.constant 0 : i32
    %c0_i32_0 = arith.constant 0 : i32
    %c0_i32_1 = arith.constant 0 : i32
    return %c0_i32, %c0_i32_0 : i32, i32
  }
  func.func @transform_8(%arg0: i32) -> (i32, i32, i32) {
    %c0_i32 = arith.constant 0 : i32
    %c0_i32_0 = arith.constant 0 : i32
    %c0_i32_1 = arith.constant 0 : i32
    return %arg0, %c0_i32, %c0_i32_0 : i32, i32, i32
  }
}

</mosaic_0001>

<llo_original>
// kernel: tpu_custom_call.1
$region0: #{tpu_custom_call.1}
  #allocation0 [shape = 'u32[]', space=smem, size = 0x4, offset = 0x4, fixed_abs, tag = 'smem constant byte address 0x4 - core index']
  #allocation1 [shape = 'u32[144,128]{1,0:T(1,128)}', space=vmem, size = 0x12000, scoped, tag = 'internal scratch']
  #allocation2 [shape = 'bf16[16,128]{1,0:T(16,128)(2,1)}', space=vmem, size = 0x1000, scoped, tag = 'scratch operand']
  %s0 = inlined_call_operand.hbm [shape: f32[2,16,128], index: 0, kind: input, shape index: {}]
  %s1 = inlined_call_operand.hbm [shape: bf16[128,384], index: 1, kind: input, shape index: {}]
  %s2 = inlined_call_operand.vmem [shape: f32[1,384], index: 2, kind: input, shape index: {}]
  %s3 = inlined_call_operand.vmem [shape: f32[2,1,16], index: 3, kind: input, shape index: {}]
  %s4 = inlined_call_operand.hbm [shape: bf16[128,128], index: 4, kind: input, shape index: {}]
  %s5 = inlined_call_operand.vmem [shape: f32[1,128], index: 5, kind: input, shape index: {}]
  %s6 = inlined_call_operand.vmem [shape: f32[1,128], index: 6, kind: input, shape index: {}]
  %s7 = inlined_call_operand.vmem [shape: f32[1,128], index: 7, kind: input, shape index: {}]
  %s8 = inlined_call_operand.hbm [shape: bf16[2,16,128], index: 8, kind: output, shape index: {}]
  %s9 = sld [smem:[#allocation0]]
  $region77: #{tpu_custom_call.1} parent=0
    _
  %s11 = ssub.s32 1, %s9
  %s12 = scalar_select 0, %s11, %s9
  $region1: #{tpu_custom_call.1} parent=0
    #allocation3 [shape = 'u8[16384]{0}', space=vmem, size = 0x4000, scoped, tag = 'input window, operand 0']
    #allocation4 [shape = 's32[2]{0}', space=sflag, size = 0x8, scoped, tag = 'scoped memory for tpu_custom_call.1']
    #allocation5 [shape = 's32[2]{0}', space=sflag, size = 0x8, scoped, tag = 'scoped memory for tpu_custom_call.1']
    #allocation6 [shape = 'u8[98304]{0}', space=vmem, size = 0x18000, scoped, tag = 'input window, operand 1, single buffered']
    #allocation7 [shape = 's32[1]{0}', space=sflag, size = 0x4, scoped, tag = 'scoped memory for tpu_custom_call.1']
    #allocation8 [shape = 'u8[32768]{0}', space=vmem, size = 0x8000, scoped, tag = 'input window, operand 4, single buffered']
    #allocation9 [shape = 'u8[8192]{0}', space=vmem, size = 0x2000, scoped, tag = 'output window, operand 0']
    %13 = vsyncpa [#allocation4], 0
    %s14 = scalar_lea.sflag [#allocation4], 1
    %15 = vsyncpa %s14, 0
    %16 = vsyncpa [#allocation7], 0
    %17 = vsyncpa [#allocation5], 0
    %s18 = scalar_lea.sflag [#allocation5], 1
    %19 = vsyncpa %s18, 0
    loop: start=0, step=1, limit=4
    $region2: #{tpu_custom_call.1} parent=1 // loop_pre_header
      _
    $region3: #{tpu_custom_call.1} parent=1 // loop_header
      %s21 = sphi 0, %s25
      %p22 = scmp.ge.s32.totalorder %s21, 4
      %s31 = sphi 0, %s33
      %s34 = sphi 0, %s31
      %s35 = sphi 0, %s34
      %s51 = sphi 0, %s35
      %s55 = sphi 0, %s55
      %s57 = sphi 0, %s55
      %s58 = sphi 0, %s57
      %s72 = sphi 0, %s58
      %s76 = sphi 0, %s76
      %s78 = sphi 0, %s76
      %s79 = sphi 0, %s78
      %s93 = sphi 0, %s79
      %s99 = sphi 0, %s101
      %s102 = sphi 0, %s99
      %s103 = sphi 0, %s102
      %s119 = sphi 0, %s103
      %s123 = sphi 0, %s123
      %s125 = sphi 0, %s123
      %s126 = sphi 0, %s125
      %s140 = sphi 0, %s126
      %s144 = sphi 0, %s144
      %s146 = sphi 0, %s144
      %s147 = sphi 0, %s146
      %s161 = sphi 0, %s147
      %s165 = sphi 0, %s165
      %s167 = sphi 0, %s165
      %s168 = sphi 0, %s167
      %s182 = sphi 0, %s168
      %s186 = sphi 0, %s186
      %s188 = sphi 0, %s186
      %s189 = sphi 0, %s188
      %s203 = sphi 0, %s189
      %s209 = sphi 0, %s211
      %s212 = sphi 0, %s209
      %s213 = sphi 0, %s212
      %s229 = sphi 0, %s213
    $region4: #{tpu_custom_call.1} parent=1 // loop_header_branch
      %24 = sbr.rel (%p22) target = $region8
    $region5: #{tpu_custom_call.1} parent=1 // loop_body
      %s26 = ssub.s32 %s21, 1
      %s27 = ssub.s32 %s21, 2
      %s28 = sadd.s32 %s21, 1
      %s29 = ssub.s32 %s21, %s28
      %p30 = scmp.eq.s32.totalorder %s29, 0
      %s32 = sadd.s32 %s31, 1
      %s33 = scalar_select %p30, %s31, %s32
      %p36 = pneg %p30
      %p37 = scmp.eq.s32.totalorder %s21, 1
      %p38 = por %p36, %p37
      %p39 = scmp.ne.s32.totalorder %s31, %s34
      %p40 = scmp.eq.s32.totalorder %s21, 0
      %p41 = por %p39, %p40
      %p42 = scmp.ne.s32.totalorder %s31, %s34
      %p43 = scmp.eq.s32.totalorder %s26, 1
      %p44 = por %p42, %p43
      %p45 = scmp.ne.s32.totalorder %s34, %s35
      %p46 = scmp.eq.s32.totalorder %s26, 0
      %p47 = por %p45, %p46
      %p48 = scmp.ne.s32.totalorder %s34, %s35
      %p49 = scmp.eq.s32.totalorder %s27, 1
      %p50 = por %p48, %p49
      %p52 = scmp.ne.s32.totalorder %s35, %s51
      %p53 = scmp.eq.s32.totalorder %s27, 0
      %p54 = por %p52, %p53
      %s56 = sadd.s32 %s55, 1
      %p59 = scmp.eq.s32.totalorder %s21, 1
      %p60 = scmp.ne.s32.totalorder %s55, %s57
      %p61 = scmp.eq.s32.totalorder %s21, 0
      %p62 = por %p60, %p61
      %p63 = scmp.ne.s32.totalorder %s55, %s57
      %p64 = scmp.eq.s32.totalorder %s26, 1
      %p65 = por %p63, %p64
      %p66 = scmp.ne.s32.totalorder %s57, %s58
      %p67 = scmp.eq.s32.totalorder %s26, 0
      %p68 = por %p66, %p67
      %p69 = scmp.ne.s32.totalorder %s57, %s58
      %p70 = scmp.eq.s32.totalorder %s27, 1
      %p71 = por %p69, %p70
      %p73 = scmp.ne.s32.totalorder %s58, %s72
      %p74 = scmp.eq.s32.totalorder %s27, 0
      %p75 = por %p73, %p74
      %s77 = sadd.s32 %s76, 1
      %p80 = scmp.eq.s32.totalorder %s21, 1
      %p81 = scmp.ne.s32.totalorder %s76, %s78
      %p82 = scmp.eq.s32.totalorder %s21, 0
      %p83 = por %p81, %p82
      %p84 = scmp.ne.s32.totalorder %s76, %s78
      %p85 = scmp.eq.s32.totalorder %s26, 1
      %p86 = por %p84, %p85
      %p87 = scmp.ne.s32.totalorder %s78, %s79
      %p88 = scmp.eq.s32.totalorder %s26, 0
      %p89 = por %p87, %p88
      %p90 = scmp.ne.s32.totalorder %s78, %s79
      %p91 = scmp.eq.s32.totalorder %s27, 1
      %p92 = por %p90, %p91
      %p94 = scmp.ne.s32.totalorder %s79, %s93
      %p95 = scmp.eq.s32.totalorder %s27, 0
      %p96 = por %p94, %p95
      %s97 = ssub.s32 %s21, %s28
      %p98 = scmp.eq.s32.totalorder %s97, 0
      %s100 = sadd.s32 %s99, 1
      %s101 = scalar_select %p98, %s99, %s100
      %p104 = pneg %p98
      %p105 = scmp.eq.s32.totalorder %s21, 1
      %p106 = por %p104, %p105
      %p107 = scmp.ne.s32.totalorder %s99, %s102
      %p108 = scmp.eq.s32.totalorder %s21, 0
      %p109 = por %p107, %p108
      %p110 = scmp.ne.s32.totalorder %s99, %s102
      %p111 = scmp.eq.s32.totalorder %s26, 1
      %p112 = por %p110, %p111
      %p113 = scmp.ne.s32.totalorder %s102, %s103
      %p114 = scmp.eq.s32.totalorder %s26, 0
      %p115 = por %p113, %p114
      %p116 = scmp.ne.s32.totalorder %s102, %s103
      %p117 = scmp.eq.s32.totalorder %s27, 1
      %p118 = por %p116, %p117
      %p120 = scmp.ne.s32.totalorder %s103, %s119
      %p121 = scmp.eq.s32.totalorder %s27, 0
      %p122 = por %p120, %p121
      %s124 = sadd.s32 %s123, 1
      %p127 = scmp.eq.s32.totalorder %s21, 1
      %p128 = scmp.ne.s32.totalorder %s123, %s125
      %p129 = scmp.eq.s32.totalorder %s21, 0
      %p130 = por %p128, %p129
      %p131 = scmp.ne.s32.totalorder %s123, %s125
      %p132 = scmp.eq.s32.totalorder %s26, 1
      %p133 = por %p131, %p132
      %p134 = scmp.ne.s32.totalorder %s125, %s126
      %p135 = scmp.eq.s32.totalorder %s26, 0
      %p136 = por %p134, %p135
      %p137 = scmp.ne.s32.totalorder %s125, %s126
      %p138 = scmp.eq.s32.totalorder %s27, 1
      %p139 = por %p137, %p138
      %p141 = scmp.ne.s32.totalorder %s126, %s140
      %p142 = scmp.eq.s32.totalorder %s27, 0
      %p143 = por %p141, %p142
      %s145 = sadd.s32 %s144, 1
      %p148 = scmp.eq.s32.totalorder %s21, 1
      %p149 = scmp.ne.s32.totalorder %s144, %s146
      %p150 = scmp.eq.s32.totalorder %s21, 0
      %p151 = por %p149, %p150
      %p152 = scmp.ne.s32.totalorder %s144, %s146
      %p153 = scmp.eq.s32.totalorder %s26, 1
      %p154 = por %p152, %p153
      %p155 = scmp.ne.s32.totalorder %s146, %s147
      %p156 = scmp.eq.s32.totalorder %s26, 0
      %p157 = por %p155, %p156
      %p158 = scmp.ne.s32.totalorder %s146, %s147
      %p159 = scmp.eq.s32.totalorder %s27, 1
      %p160 = por %p158, %p159
      %p162 = scmp.ne.s32.totalorder %s147, %s161
      %p163 = scmp.eq.s32.totalorder %s27, 0
      %p164 = por %p162, %p163
      %s166 = sadd.s32 %s165, 1
      %p169 = scmp.eq.s32.totalorder %s21, 1
      %p170 = scmp.ne.s32.totalorder %s165, %s167
      %p171 = scmp.eq.s32.totalorder %s21, 0
      %p172 = por %p170, %p171
      %p173 = scmp.ne.s32.totalorder %s165, %s167
      %p174 = scmp.eq.s32.totalorder %s26, 1
      %p175 = por %p173, %p174
      %p176 = scmp.ne.s32.totalorder %s167, %s168
      %p177 = scmp.eq.s32.totalorder %s26, 0
      %p178 = por %p176, %p177
      %p179 = scmp.ne.s32.totalorder %s167, %s168
      %p180 = scmp.eq.s32.totalorder %s27, 1
      %p181 = por %p179, %p180
      %p183 = scmp.ne.s32.totalorder %s168, %s182
      %p184 = scmp.eq.s32.totalorder %s27, 0
      %p185 = por %p183, %p184
      %s187 = sadd.s32 %s186, 1
      %p190 = scmp.eq.s32.totalorder %s21, 1
      %p191 = scmp.ne.s32.totalorder %s186, %s188
      %p192 = scmp.eq.s32.totalorder %s21, 0
      %p193 = por %p191, %p192
      %p194 = scmp.ne.s32.totalorder %s186, %s188
      %p195 = scmp.eq.s32.totalorder %s26, 1
      %p196 = por %p194, %p195
      %p197 = scmp.ne.s32.totalorder %s188, %s189
      %p198 = scmp.eq.s32.totalorder %s26, 0
      %p199 = por %p197, %p198
      %p200 = scmp.ne.s32.totalorder %s188, %s189
      %p201 = scmp.eq.s32.totalorder %s27, 1
      %p202 = por %p200, %p201
      %p204 = scmp.ne.s32.totalorder %s189, %s203
      %p205 = scmp.eq.s32.totalorder %s27, 0
      %p206 = por %p204, %p205
      %s207 = ssub.s32 %s21, %s28
      %p208 = scmp.eq.s32.totalorder %s207, 0
      %s210 = sadd.s32 %s209, 1
      %s211 = scalar_select %p208, %s209, %s210
      %p214 = pneg %p208
      %p215 = scmp.eq.s32.totalorder %s21, 1
      %p216 = por %p214, %p215
      %p217 = scmp.ne.s32.totalorder %s209, %s212
      %p218 = scmp.eq.s32.totalorder %s21, 0
      %p219 = por %p217, %p218
      %p220 = scmp.ne.s32.totalorder %s209, %s212
      %p221 = scmp.eq.s32.totalorder %s26, 1
      %p222 = por %p220, %p221
      %p223 = scmp.ne.s32.totalorder %s212, %s213
      %p224 = scmp.eq.s32.totalorder %s26, 0
      %p225 = por %p223, %p224
      %p226 = scmp.ne.s32.totalorder %s212, %s213
      %p227 = scmp.eq.s32.totalorder %s27, 1
      %p228 = por %p226, %p227
      %p230 = scmp.ne.s32.totalorder %s213, %s229
      %p231 = scmp.eq.s32.totalorder %s27, 0
      %p232 = por %p230, %p231
      %p233 = scmp.le.s32.totalorder 1, %s21
      %p234 = scmp.lt.s32.totalorder %s21, 3
      %p235 = pnand %p233, %p234
      %p236 = pneg %p235
      // Predicated region
      $region9: #{tpu_custom_call.1} parent=5 // pred_check
        _
      $region10: #{tpu_custom_call.1} parent=5 // pred_check_branch
        %238 = sbr.rel (%p235) target = $region12
      $region11: #{tpu_custom_call.1} parent=5 // pred_region
        %s239 = ssub.s32 %s21, 1
        // Predicated region
        $region13: #{tpu_custom_call.1} parent=11 // pred_check
          %p240 = pneg %p68
        $region14: #{tpu_custom_call.1} parent=11 // pred_check_branch
          %242 = sbr.rel (%p240) target = $region16
        $region15: #{tpu_custom_call.1} parent=11 // pred_region
          %s244 = ssub.s32 3072, 3072
          %245 = vsyncadd [#allocation7], %s244
          %s246 = sshll.u32 [#allocation6], 4
          %s247 = int_to_ptr.vmem [resolvable:$true] %s246
          %252 = dma.hbm_to_vmem [thread:$0]  %s1, 3072, %s247, [#allocation7], 192, 192, 12
        $region16: #{tpu_custom_call.1} parent=11 // pred_fallthru
          _
        // Predicated region
        $region17: #{tpu_custom_call.1} parent=11 // pred_check
          %p253 = pneg %p89
        $region18: #{tpu_custom_call.1} parent=11 // pred_check_branch
          %255 = sbr.rel (%p253) target = $region20
        $region19: #{tpu_custom_call.1} parent=11 // pred_region
          _
        $region20: #{tpu_custom_call.1} parent=11 // pred_fallthru
          _
        // Predicated region
        $region21: #{tpu_custom_call.1} parent=11 // pred_check
          %p256 = pneg %p136
        $region22: #{tpu_custom_call.1} parent=11 // pred_check_branch
          %258 = sbr.rel (%p256) target = $region24
        $region23: #{tpu_custom_call.1} parent=11 // pred_region
          %s260 = ssub.s32 1024, 1024
          %261 = vsyncadd [#allocation7], %s260
          %s262 = sshll.u32 [#allocation8], 4
          %s263 = int_to_ptr.vmem [resolvable:$true] %s262
          %268 = dma.hbm_to_vmem [thread:$0]  %s4, 1024, %s263, [#allocation7], 64, 64, 4
        $region24: #{tpu_custom_call.1} parent=11 // pred_fallthru
          _
        // Predicated region
        $region25: #{tpu_custom_call.1} parent=11 // pred_check
          %p269 = pneg %p157
        $region26: #{tpu_custom_call.1} parent=11 // pred_check_branch
          %271 = sbr.rel (%p269) target = $region28
        $region27: #{tpu_custom_call.1} parent=11 // pred_region
          _
        $region28: #{tpu_custom_call.1} parent=11 // pred_fallthru
          _
        // Predicated region
        $region29: #{tpu_custom_call.1} parent=11 // pred_check
          %p272 = pneg %p178
        $region30: #{tpu_custom_call.1} parent=11 // pred_check_branch
          %274 = sbr.rel (%p272) target = $region32
        $region31: #{tpu_custom_call.1} parent=11 // pred_region
          _
        $region32: #{tpu_custom_call.1} parent=11 // pred_fallthru
          _
        // Predicated region
        $region33: #{tpu_custom_call.1} parent=11 // pred_check
          %p275 = pneg %p199
        $region34: #{tpu_custom_call.1} parent=11 // pred_check_branch
          %277 = sbr.rel (%p275) target = $region36
        $region35: #{tpu_custom_call.1} parent=11 // pred_region
          _
        $region36: #{tpu_custom_call.1} parent=11 // pred_fallthru
          _
      $region12: #{tpu_custom_call.1} parent=5 // pred_fallthru
        _
      %p278 = scmp.lt.s32.totalorder %s21, 2
      // Predicated region
      $region37: #{tpu_custom_call.1} parent=5 // pred_check
        %p279 = pneg %p278
      $region38: #{tpu_custom_call.1} parent=5 // pred_check_branch
        %281 = sbr.rel (%p279) target = $region40
      $region39: #{tpu_custom_call.1} parent=5 // pred_region
        // Predicated region
        $region41: #{tpu_custom_call.1} parent=39 // pred_check
          %p282 = pneg %p41
        $region42: #{tpu_custom_call.1} parent=39 // pred_check_branch
          %284 = sbr.rel (%p282) target = $region44
        $region43: #{tpu_custom_call.1} parent=39 // pred_region
          %s285 = sand.u32 %s31, 1
          %s286 = scalar_lea.sflag [#allocation4], %s285
          %s287 = sand.u32 %s31, 1
          %s288 = smul.addr %s287, 16
          %s289 = scalar_lea.vmem [#allocation3], %s288
          %s291 = ssub.s32 256, 256
          %292 = vsyncadd %s286, %s291
          %s293 = smul.addr %s21, 2
          %s294 = smul.addr %s293, 128
          %s295 = scalar_lea.hbm %s0, %s294
          %s296 = sshll.u32 %s289, 4
          %s297 = int_to_ptr.vmem [resolvable:$true] %s296
          %302 = dma.hbm_to_vmem [thread:$0]  %s295, 256, %s297, %s286, 128, 128, 8
        $region44: #{tpu_custom_call.1} parent=39 // pred_fallthru
          _
        // Predicated region
        $region45: #{tpu_custom_call.1} parent=39 // pred_check
          %p303 = pneg %p109
        $region46: #{tpu_custom_call.1} parent=39 // pred_check_branch
          %305 = sbr.rel (%p303) target = $region48
        $region47: #{tpu_custom_call.1} parent=39 // pred_region
          %p306 = scmp.lt.s32.totalorder %s21, 1
          %s307 = scalar_select %p306, %s21, 1
          %s308 = scalar_lea.vmem %s3, %s307
        $region48: #{tpu_custom_call.1} parent=39 // pred_fallthru
          _
      $region40: #{tpu_custom_call.1} parent=5 // pred_fallthru
        _
      %p309 = scmp.le.s32.totalorder 1, %s21
      %p310 = scmp.lt.s32.totalorder %s21, 3
      %p311 = pnand %p309, %p310
      %p312 = pneg %p311
      // Predicated region
      $region49: #{tpu_custom_call.1} parent=5 // pred_check
        _
      $region50: #{tpu_custom_call.1} parent=5 // pred_check_branch
        %314 = sbr.rel (%p311) target = $region52
      $region51: #{tpu_custom_call.1} parent=5 // pred_region
        %s315 = ssub.s32 %s21, 1
        %s316 = sand.u32 %s34, 1
        %s317 = scalar_lea.sflag [#allocation4], %s316
        %s318 = sand.u32 %s34, 1
        %s319 = smul.addr %s318, 16
        %s320 = scalar_lea.vmem [#allocation3], %s319
        // Predicated region
        $region53: #{tpu_custom_call.1} parent=51 // pred_check
          %p321 = pneg %p47
        $region54: #{tpu_custom_call.1} parent=51 // pred_check_branch
          %323 = sbr.rel (%p321) target = $region56
        $region55: #{tpu_custom_call.1} parent=51 // pred_region
          %324 = dma.done %s317, 256
        $region56: #{tpu_custom_call.1} parent=51 // pred_fallthru
          _
        // Predicated region
        $region57: #{tpu_custom_call.1} parent=51 // pred_check
          %p325 = pneg %p68
        $region58: #{tpu_custom_call.1} parent=51 // pred_check_branch
          %327 = sbr.rel (%p325) target = $region60
        $region59: #{tpu_custom_call.1} parent=51 // pred_region
          %328 = dma.done [#allocation7], 3072
        $region60: #{tpu_custom_call.1} parent=51 // pred_fallthru
          _
        // Predicated region
        $region61: #{tpu_custom_call.1} parent=51 // pred_check
          %p329 = pneg %p136
        $region62: #{tpu_custom_call.1} parent=51 // pred_check_branch
          %331 = sbr.rel (%p329) target = $region64
        $region63: #{tpu_custom_call.1} parent=51 // pred_region
          %332 = dma.done [#allocation7], 1024
        $region64: #{tpu_custom_call.1} parent=51 // pred_fallthru
          _
        %s333 = sand.u32 %s34, 1
        %s334 = scalar_lea.sflag [#allocation4], %s333
        %s335 = sand.u32 %s34, 1
        %s336 = smul.addr %s335, 16
        %s337 = scalar_lea.vmem [#allocation3], %s336
        %p338 = pneg %p47
        %p339 = pneg %p44
        %p340 = pneg %p68
        %p341 = pneg %p65
        %p342 = pneg %p89
        %p343 = pneg %p86
        %p344 = scmp.lt.s32.totalorder %s26, 1
        %s345 = scalar_select %p344, %s26, 1
        %s346 = scalar_lea.vmem %s3, %s345
        %p347 = pneg %p115
        %p348 = pneg %p112
        %p349 = pneg %p136
        %p350 = pneg %p133
        %p351 = pneg %p157
        %p352 = pneg %p154
        %p353 = pneg %p178
        %p354 = pneg %p175
        %p355 = pneg %p199
        %p356 = pneg %p196
        %p357 = pneg %p225
        %p358 = pneg %p222
        %s359 = sand.u32 %s212, 1
        %s360 = scalar_lea.sflag [#allocation5], %s359
        %s361 = sand.u32 %s212, 1
        %s362 = smul.addr %s361, 8
        %s363 = scalar_lea.vmem [#allocation9], %s362
        %p364 = scmp.lt.s32.totalorder %s26, 1
        %s365 = scalar_select %p364, %s26, 1
        %s366 = scalar_lea.vmem %s3, %s365
        %v368 = vld [vmem:[%s320] sm:$0xff]
        %v369 = vld [vmem:[%s320 + $0x8] sm:$0xff]
        %v370 = vpack.c.bf16 %v369, %v368
        %v371 = vld [vmem:[#allocation6] sm:$0xff]
        %v372 = vld [vmem:[#allocation6 + $0x8] sm:$0xf]
        %v373 = vld [vmem:[#allocation6 + $0xc] sm:$0xff]
        %v374 = vld [vmem:[#allocation6 + $0x14] sm:$0xf]
        %v375 = vld [vmem:[#allocation6 + $0x18] sm:$0xff]
        %v376 = vld [vmem:[#allocation6 + $0x20] sm:$0xf]
        %v377 = vld [vmem:[#allocation6 + $0x24] sm:$0xff]
        %v378 = vld [vmem:[#allocation6 + $0x2c] sm:$0xf]
        %v379 = vld [vmem:[#allocation6 + $0x30] sm:$0xff]
        %v380 = vld [vmem:[#allocation6 + $0x38] sm:$0xf]
        %v381 = vld [vmem:[#allocation6 + $0x3c] sm:$0xff]
        %v382 = vld [vmem:[#allocation6 + $0x44] sm:$0xf]
        %v383 = vld [vmem:[#allocation6 + $0x48] sm:$0xff]
        %v384 = vld [vmem:[#allocation6 + $0x50] sm:$0xf]
        %v385 = vld [vmem:[#allocation6 + $0x54] sm:$0xff]
        %v386 = vld [vmem:[#allocation6 + $0x5c] sm:$0xf]
        %v387 = vld [vmem:[#allocation6 + $0x60] sm:$0xff]
        %v388 = vld [vmem:[#allocation6 + $0x68] sm:$0xf]
        %v389 = vld [vmem:[#allocation6 + $0x6c] sm:$0xff]
        %v390 = vld [vmem:[#allocation6 + $0x74] sm:$0xf]
        %v391 = vld [vmem:[#allocation6 + $0x78] sm:$0xff]
        %v392 = vld [vmem:[#allocation6 + $0x80] sm:$0xf]
        %v393 = vld [vmem:[#allocation6 + $0x84] sm:$0xff]
        %v394 = vld [vmem:[#allocation6 + $0x8c] sm:$0xf]
        %v395 = vld [vmem:[#allocation6 + $0x90] sm:$0xff]
        %v396 = vld [vmem:[#allocation6 + $0x98] sm:$0xf]
        %v397 = vld [vmem:[#allocation6 + $0x9c] sm:$0xff]
        %v398 = vld [vmem:[#allocation6 + $0xa4] sm:$0xf]
        %v399 = vld [vmem:[#allocation6 + $0xa8] sm:$0xff]
        %v400 = vld [vmem:[#allocation6 + $0xb0] sm:$0xf]
        %v401 = vld [vmem:[#allocation6 + $0xb4] sm:$0xff]
        %v402 = vld [vmem:[#allocation6 + $0xbc] sm:$0xf]
        %v403 = vld [vmem:[%s2] sm:$0x7]
        %v405 = vlaneseq
        %v406 = vshrl.u32 %v405, 7
        %v407 = vsub.s32 0, %v406
        %v408 = vrot.slane %v403, %v407
        %v409 = vlaneseq
        %v410 = vshrl.u32 %v409, 7
        %v411 = vsub.s32 1, %v410
        %v412 = vrot.slane %v403, %v411
        %v413 = vlaneseq
        %v414 = vshrl.u32 %v413, 7
        %v415 = vsub.s32 2, %v414
        %v416 = vrot.slane %v403, %v415
        %v452 = vunpack.c.l.b16 %v371
        %v453 = vunpack.c.h.b16 %v371
        %v454 = vunpack.c.l.b16 %v372
        %v455 = vunpack.c.l.b16 %v373
        %v456 = vunpack.c.h.b16 %v373
        %v457 = vunpack.c.l.b16 %v374
        %v458 = vunpack.c.l.b16 %v375
        %v459 = vunpack.c.h.b16 %v375
        %v460 = vunpack.c.l.b16 %v376
        %v461 = vunpack.c.l.b16 %v377
        %v462 = vunpack.c.h.b16 %v377
        %v463 = vunpack.c.l.b16 %v378
        %v464 = vunpack.c.l.b16 %v379
        %v465 = vunpack.c.h.b16 %v379
        %v466 = vunpack.c.l.b16 %v380
        %v467 = vunpack.c.l.b16 %v381
        %v468 = vunpack.c.h.b16 %v381
        %v469 = vunpack.c.l.b16 %v382
        %v470 = vunpack.c.l.b16 %v383
        %v471 = vunpack.c.h.b16 %v383
        %v472 = vunpack.c.l.b16 %v384
        %v473 = vunpack.c.l.b16 %v385
        %v474 = vunpack.c.h.b16 %v385
        %v475 = vunpack.c.l.b16 %v386
        %v476 = vunpack.c.l.b16 %v387
        %v477 = vunpack.c.h.b16 %v387
        %v478 = vunpack.c.l.b16 %v388
        %v479 = vunpack.c.l.b16 %v389
        %v480 = vunpack.c.h.b16 %v389
        %v481 = vunpack.c.l.b16 %v390
        %v482 = vunpack.c.l.b16 %v391
        %v483 = vunpack.c.h.b16 %v391
        %v484 = vunpack.c.l.b16 %v392
        %v485 = vunpack.c.l.b16 %v393
        %v486 = vunpack.c.h.b16 %v393
        %v487 = vunpack.c.l.b16 %v394
        %v488 = vunpack.c.l.b16 %v395
        %v489 = vunpack.c.h.b16 %v395
        %v490 = vunpack.c.l.b16 %v396
        %v491 = vunpack.c.l.b16 %v397
        %v492 = vunpack.c.h.b16 %v397
        %v493 = vunpack.c.l.b16 %v398
        %v494 = vunpack.c.l.b16 %v399
        %v495 = vunpack.c.h.b16 %v399
        %v496 = vunpack.c.l.b16 %v400
        %v497 = vunpack.c.l.b16 %v401
        %v498 = vunpack.c.h.b16 %v401
        %v499 = vunpack.c.l.b16 %v402
        %v500 = vpack.c.b16 %v455, %v452
        %v501 = vpack.c.b16 %v456, %v453
        %v502 = vpack.c.b16 %v457, %v454
        %v503 = vpack.c.b16 %v461, %v458
        %v504 = vpack.c.b16 %v462, %v459
        %v505 = vpack.c.b16 %v463, %v460
        %v506 = vpack.c.b16 %v467, %v464
        %v507 = vpack.c.b16 %v468, %v465
        %v508 = vpack.c.b16 %v469, %v466
        %v509 = vpack.c.b16 %v473, %v470
        %v510 = vpack.c.b16 %v474, %v471
        %v511 = vpack.c.b16 %v475, %v472
        %v512 = vpack.c.b16 %v479, %v476
        %v513 = vpack.c.b16 %v480, %v477
        %v514 = vpack.c.b16 %v481, %v478
        %v515 = vpack.c.b16 %v485, %v482
        %v516 = vpack.c.b16 %v486, %v483
        %v517 = vpack.c.b16 %v487, %v484
        %v518 = vpack.c.b16 %v491, %v488
        %v519 = vpack.c.b16 %v492, %v489
        %v520 = vpack.c.b16 %v493, %v490
        %v521 = vpack.c.b16 %v497, %v494
        %v522 = vpack.c.b16 %v498, %v495
        %v523 = vpack.c.b16 %v499, %v496
        %548 = vmatprep.subr.bf16.mxu0 %v501
        %549 = vmatpush1.bf16.msra.mxu0 %v500
        %550 = vmatprep.subr.bf16.mxu0 %v504
        %551 = vmatpush1.bf16.msra.mxu0 %v503
        %552 = vmatprep.subr.bf16.mxu0 %v507
        %553 = vmatpush1.bf16.msra.mxu0 %v506
        %554 = vmatprep.subr.bf16.mxu0 %v510
        %555 = vmatpush1.bf16.msra.mxu0 %v509
        %556 = vmatprep.subr.bf16.mxu0 %v513
        %557 = vmatpush1.bf16.msra.mxu0 %v512
        %558 = vmatprep.subr.bf16.mxu0 %v516
        %559 = vmatpush1.bf16.msra.mxu0 %v515
        %560 = vmatprep.subr.bf16.mxu0 %v519
        %561 = vmatpush1.bf16.msra.mxu0 %v518
        %562 = vmatprep.subr.bf16.mxu0 %v522
        %563 = vmatpush1.bf16.msra.mxu0 %v521
        %564 = vmatprep.subr.bf16.mxu0 0
        %565 = vmatpush1.bf16.msra.mxu0 0
        %566 = vmatprep.subr.bf16.mxu0 0
        %567 = vmatpush1.bf16.msra.mxu0 0
        %568 = vmatprep.subr.bf16.mxu0 0
        %569 = vmatpush1.bf16.msra.mxu0 0
        %570 = vmatprep.subr.bf16.mxu0 0
        %571 = vmatpush1.bf16.msra.mxu0 0
        %572 = vmatprep.subr.bf16.mxu0 0
        %573 = vmatpush1.bf16.msra.mxu0 0
        %574 = vmatprep.subr.bf16.mxu0 0
        %575 = vmatpush1.bf16.msra.mxu0 0
        %576 = vmatprep.subr.bf16.mxu0 0
        %577 = vmatpush1.bf16.msra.mxu0 0
        %578 = vmatprep.subr.bf16.mxu0 0
        %579 = vmatpush1.bf16.msra.mxu0 0
        %580 = vmatprep.mubr.bf16.mxu0 0
        %581 = vmatmul.mubr.bf16.gmra.mrb[0].mxu0 %v370
        %v582 = vpop.f32.mrb[0].mxu0
        %v583 = vadd.f32 %v408, %v582
        %v584 = vpop.f32.mrb[0].mxu0
        %v585 = vadd.f32 %v412, %v584
        %v586 = vpop.f32.mrb[0].mxu0
        %v587 = vadd.f32 %v408, %v586
        %v588 = vpop.f32.mrb[0].mxu0
        %v589 = vadd.f32 %v412, %v588
        %590 = vdwg.mxu0
        %591 = vmatprep.subr.bf16.mxu0 0
        %592 = vmatpush1.bf16.msra.mxu0 %v502
        %593 = vmatprep.subr.bf16.mxu0 0
        %594 = vmatpush1.bf16.msra.mxu0 %v505
        %595 = vmatprep.subr.bf16.mxu0 0
        %596 = vmatpush1.bf16.msra.mxu0 %v508
        %597 = vmatprep.subr.bf16.mxu0 0
        %598 = vmatpush1.bf16.msra.mxu0 %v511
        %599 = vmatprep.subr.bf16.mxu0 0
        %600 = vmatpush1.bf16.msra.mxu0 %v514
        %601 = vmatprep.subr.bf16.mxu0 0
        %602 = vmatpush1.bf16.msra.mxu0 %v517
        %603 = vmatprep.subr.bf16.mxu0 0
        %604 = vmatpush1.bf16.msra.mxu0 %v520
        %605 = vmatprep.subr.bf16.mxu0 0
        %606 = vmatpush1.bf16.msra.mxu0 %v523
        %607 = vmatprep.subr.bf16.mxu0 0
        %608 = vmatpush1.bf16.msra.mxu0 0
        %609 = vmatprep.subr.bf16.mxu0 0
        %610 = vmatpush1.bf16.msra.mxu0 0
        %611 = vmatprep.subr.bf16.mxu0 0
        %612 = vmatpush1.bf16.msra.mxu0 0
        %613 = vmatprep.subr.bf16.mxu0 0
        %614 = vmatpush1.bf16.msra.mxu0 0
        %615 = vmatprep.subr.bf16.mxu0 0
        %616 = vmatpush1.bf16.msra.mxu0 0
        %617 = vmatprep.subr.bf16.mxu0 0
        %618 = vmatpush1.bf16.msra.mxu0 0
        %619 = vmatprep.subr.bf16.mxu0 0
        %620 = vmatpush1.bf16.msra.mxu0 0
        %621 = vmatprep.subr.bf16.mxu0 0
        %622 = vmatpush1.bf16.msra.mxu0 0
        %623 = vmatprep.mubr.bf16.mxu0 0
        %624 = vmatmul.mubr.bf16.gmra.mrb[0].mxu0 %v370
        %v625 = vpop.f32.mrb[0].mxu0
        %v626 = vadd.f32 %v416, %v625
        %v627 = vpop.f32.mrb[0].mxu0
        %v628 = vpop.f32.mrb[0].mxu0
        %v629 = vadd.f32 %v416, %v628
        %v630 = vpop.f32.mrb[0].mxu0
        %631 = vdwg.mxu0
        %v632 = vld [vmem:[%s366] sm:$0x1]
        %v633 = vpack.c.bf16 %v587, %v583
        %v634 = vpack.c.bf16 %v589, %v585
        %v636 = vlaneseq
        %v637 = vshrl.u32 %v636, 7
        %v638 = vsub.s32 0, %v637
        %v639 = vrot.slane %v632, %v638
        %vm641 = vcmask 523264
        %v643 = vsel %vm641, %v633, 0
        %v646 = vsel %vm641, %v634, 0
        %648 = vmatprep.subr.bf16.mxu0 0
        %649 = vmatpush1.bf16.xpose.msra.mxu0 %v646
        %650 = vmatprep.subr.bf16.mxu0 0
        %651 = vmatpush1.bf16.xpose.msra.mxu0 0
        %652 = vmatprep.subr.bf16.mxu0 0
        %653 = vmatpush1.bf16.xpose.msra.mxu0 0
        %654 = vmatprep.subr.bf16.mxu0 0
        %655 = vmatpush1.bf16.xpose.msra.mxu0 0
        %656 = vmatprep.subr.bf16.mxu0 0
        %657 = vmatpush1.bf16.xpose.msra.mxu0 0
        %658 = vmatprep.subr.bf16.mxu0 0
        %659 = vmatpush1.bf16.xpose.msra.mxu0 0
        %660 = vmatprep.subr.bf16.mxu0 0
        %661 = vmatpush1.bf16.xpose.msra.mxu0 0
        %662 = vmatprep.subr.bf16.mxu0 0
        %663 = vmatpush1.bf16.xpose.msra.mxu0 0
        %664 = vmatprep.subr.bf16.mxu0 0
        %665 = vmatpush1.bf16.xpose.msra.mxu0 0
        %666 = vmatprep.subr.bf16.mxu0 0
        %667 = vmatpush1.bf16.xpose.msra.mxu0 0
        %668 = vmatprep.subr.bf16.mxu0 0
        %669 = vmatpush1.bf16.xpose.msra.mxu0 0
        %670 = vmatprep.subr.bf16.mxu0 0
        %671 = vmatpush1.bf16.xpose.msra.mxu0 0
        %672 = vmatprep.subr.bf16.mxu0 0
        %673 = vmatpush1.bf16.xpose.msra.mxu0 0
        %674 = vmatprep.subr.bf16.mxu0 0
        %675 = vmatpush1.bf16.xpose.msra.mxu0 0
        %676 = vmatprep.subr.bf16.mxu0 0
        %677 = vmatpush1.bf16.xpose.msra.mxu0 0
        %678 = vmatprep.subr.bf16.mxu0 0
        %679 = vmatpush1.bf16.xpose.msra.mxu0 0
        %680 = vmatprep.mubr.bf16.mxu0 0
        %681 = vmatmul.mubr.bf16.gmra.mrb[0].mxu0 %v643
        %v682 = vpop.f32.mrb[0].mxu0
        %v683 = vadd.f32 %v639, %v682
        %v684 = vpop.f32.mrb[0].mxu0
        %v685 = vpop.f32.mrb[0].mxu0
        %v686 = vadd.f32 %v639, %v685
        %v687 = vpop.f32.mrb[0].mxu0
        %688 = vdwg.mxu0
        %vm689 = vcmask 130048
        %v690 = vsel %vm689, %v683, -inf
        %691 = vmax.xlane.f32.xlu0 %v690
        %v692 = vpop.xlane.xlu0 %691
        %v693 = vsel %vm689, %v686, -inf
        %694 = vmax.xlane.f32.xlu0 %v693
        %v695 = vpop.xlane.xlu0 %694
        %v696 = vsub.f32 %v683, %v692
        %v697 = vsub.f32 %v686, %v695
        %v698 = vmul.f32 %v696, 1.442695
        %v699 = vpow.pop %v698
        %v700 = vmul.f32 %v697, 1.442695
        %v701 = vpow.pop %v700
        %v702 = vsel %vm689, %v699, 0.0
        %703 = vadd.xlane.f32.xlu0 %v702
        %v704 = vpop.xlane.xlu0 %703
        %v705 = vsel %vm689, %v701, 0.0
        %706 = vadd.xlane.f32.xlu0 %v705
        %v707 = vpop.xlane.xlu0 %706
        %v708 = vrcp.pop %v704
        %v709 = vrcp.pop %v707
        %v710 = vmul.f32 %v699, %v708
        %v711 = vmul.f32 %v701, %v709
        %v712 = vpack.c.bf16 %v711, %v710
        %v713 = vpack.c.bf16 %v629, %v626
        %v715 = vsel %vm689, %v712, 0
        %717 = vmatprep.subr.bf16.mxu0 0
        %718 = vmatpush1.bf16.msra.mxu0 %v713
        %719 = vmatprep.subr.bf16.mxu0 0
        %720 = vmatpush1.bf16.msra.mxu0 0
        %721 = vmatprep.subr.bf16.mxu0 0
        %722 = vmatpush1.bf16.msra.mxu0 0
        %723 = vmatprep.subr.bf16.mxu0 0
        %724 = vmatpush1.bf16.msra.mxu0 0
        %725 = vmatprep.subr.bf16.mxu0 0
        %726 = vmatpush1.bf16.msra.mxu0 0
        %727 = vmatprep.subr.bf16.mxu0 0
        %728 = vmatpush1.bf16.msra.mxu0 0
        %729 = vmatprep.subr.bf16.mxu0 0
        %730 = vmatpush1.bf16.msra.mxu0 0
        %731 = vmatprep.subr.bf16.mxu0 0
        %732 = vmatpush1.bf16.msra.mxu0 0
        %733 = vmatprep.subr.bf16.mxu0 0
        %734 = vmatpush1.bf16.msra.mxu0 0
        %735 = vmatprep.subr.bf16.mxu0 0
        %736 = vmatpush1.bf16.msra.mxu0 0
        %737 = vmatprep.subr.bf16.mxu0 0
        %738 = vmatpush1.bf16.msra.mxu0 0
        %739 = vmatprep.subr.bf16.mxu0 0
        %740 = vmatpush1.bf16.msra.mxu0 0
        %741 = vmatprep.subr.bf16.mxu0 0
        %742 = vmatpush1.bf16.msra.mxu0 0
        %743 = vmatprep.subr.bf16.mxu0 0
        %744 = vmatpush1.bf16.msra.mxu0 0
        %745 = vmatprep.subr.bf16.mxu0 0
        %746 = vmatpush1.bf16.msra.mxu0 0
        %747 = vmatprep.subr.bf16.mxu0 0
        %748 = vmatpush1.bf16.msra.mxu0 0
        %749 = vmatprep.mubr.bf16.mxu0 0
        %750 = vmatmul.mubr.bf16.gmra.mrb[0].mxu0 %v715
        %v751 = vpop.f32.mrb[0].mxu0
        %v752 = vadd.f32 0.0, %v751
        %v753 = vpop.f32.mrb[0].mxu0
        %v754 = vpop.f32.mrb[0].mxu0
        %v755 = vadd.f32 0.0, %v754
        %v756 = vpop.f32.mrb[0].mxu0
        %757 = vdwg.mxu0
        %v758 = vpack.c.bf16 %v755, %v752
        %759 = vst.msk [vmem:[#allocation2] sm:$0xff] %vm641, %v758
        %761 = vrot.lane.b32.xlu0 %v633, 64
        %v762 = vpop.permute.xlu0 %761
        %764 = vrot.lane.b32.xlu0 %v634, 64
        %v765 = vpop.permute.xlu0 %764
        %v767 = vsel %vm641, %v762, 0
        %v770 = vsel %vm641, %v765, 0
        %772 = vmatprep.subr.bf16.mxu0 0
        %773 = vmatpush1.bf16.xpose.msra.mxu0 %v770
        %774 = vmatprep.subr.bf16.mxu0 0
        %775 = vmatpush1.bf16.xpose.msra.mxu0 0
        %776 = vmatprep.subr.bf16.mxu0 0
        %777 = vmatpush1.bf16.xpose.msra.mxu0 0
        %778 = vmatprep.subr.bf16.mxu0 0
        %779 = vmatpush1.bf16.xpose.msra.mxu0 0
        %780 = vmatprep.subr.bf16.mxu0 0
        %781 = vmatpush1.bf16.xpose.msra.mxu0 0
        %782 = vmatprep.subr.bf16.mxu0 0
        %783 = vmatpush1.bf16.xpose.msra.mxu0 0
        %784 = vmatprep.subr.bf16.mxu0 0
        %785 = vmatpush1.bf16.xpose.msra.mxu0 0
        %786 = vmatprep.subr.bf16.mxu0 0
        %787 = vmatpush1.bf16.xpose.msra.mxu0 0
        %788 = vmatprep.subr.bf16.mxu0 0
        %789 = vmatpush1.bf16.xpose.msra.mxu0 0
        %790 = vmatprep.subr.bf16.mxu0 0
        %791 = vmatpush1.bf16.xpose.msra.mxu0 0
        %792 = vmatprep.subr.bf16.mxu0 0
        %793 = vmatpush1.bf16.xpose.msra.mxu0 0
        %794 = vmatprep.subr.bf16.mxu0 0
        %795 = vmatpush1.bf16.xpose.msra.mxu0 0
        %796 = vmatprep.subr.bf16.mxu0 0
        %797 = vmatpush1.bf16.xpose.msra.mxu0 0
        %798 = vmatprep.subr.bf16.mxu0 0
        %799 = vmatpush1.bf16.xpose.msra.mxu0 0
        %800 = vmatprep.subr.bf16.mxu0 0
        %801 = vmatpush1.bf16.xpose.msra.mxu0 0
        %802 = vmatprep.subr.bf16.mxu0 0
        %803 = vmatpush1.bf16.xpose.msra.mxu0 0
        %804 = vmatprep.mubr.bf16.mxu0 0
        %805 = vmatmul.mubr.bf16.gmra.mrb[0].mxu0 %v767
        %v806 = vpop.f32.mrb[0].mxu0
        %v807 = vadd.f32 %v639, %v806
        %v808 = vpop.f32.mrb[0].mxu0
        %v809 = vpop.f32.mrb[0].mxu0
        %v810 = vadd.f32 %v639, %v809
        %v811 = vpop.f32.mrb[0].mxu0
        %812 = vdwg.mxu0
        %v813 = vsel %vm689, %v807, -inf
        %814 = vmax.xlane.f32.xlu0 %v813
        %v815 = vpop.xlane.xlu0 %814
        %v816 = vsel %vm689, %v810, -inf
        %817 = vmax.xlane.f32.xlu0 %v816
        %v818 = vpop.xlane.xlu0 %817
        %v819 = vsub.f32 %v807, %v815
        %v820 = vsub.f32 %v810, %v818
        %v821 = vmul.f32 %v819, 1.442695
        %v822 = vpow.pop %v821
        %v823 = vmul.f32 %v820, 1.442695
        %v824 = vpow.pop %v823
        %v825 = vsel %vm689, %v822, 0.0
        %826 = vadd.xlane.f32.xlu0 %v825
        %v827 = vpop.xlane.xlu0 %826
        %v828 = vsel %vm689, %v824, 0.0
        %829 = vadd.xlane.f32.xlu0 %v828
        %v830 = vpop.xlane.xlu0 %829
        %v831 = vrcp.pop %v827
        %v832 = vrcp.pop %v830
        %v833 = vmul.f32 %v822, %v831
        %v834 = vmul.f32 %v824, %v832
        %v835 = vpack.c.bf16 %v834, %v833
        %837 = vrot.lane.b32.xlu0 %v713, 64
        %v838 = vpop.permute.xlu0 %837
        %v841 = vsel %vm689, %v835, 0
        %843 = vmatprep.subr.bf16.mxu0 0
        %844 = vmatpush1.bf16.msra.mxu0 %v838
        %845 = vmatprep.subr.bf16.mxu0 0
        %846 = vmatpush1.bf16.msra.mxu0 0
        %847 = vmatprep.subr.bf16.mxu0 0
        %848 = vmatpush1.bf16.msra.mxu0 0
        %849 = vmatprep.subr.bf16.mxu0 0
        %850 = vmatpush1.bf16.msra.mxu0 0
        %851 = vmatprep.subr.bf16.mxu0 0
        %852 = vmatpush1.bf16.msra.mxu0 0
        %853 = vmatprep.subr.bf16.mxu0 0
        %854 = vmatpush1.bf16.msra.mxu0 0
        %855 = vmatprep.subr.bf16.mxu0 0
        %856 = vmatpush1.bf16.msra.mxu0 0
        %857 = vmatprep.subr.bf16.mxu0 0
        %858 = vmatpush1.bf16.msra.mxu0 0
        %859 = vmatprep.subr.bf16.mxu0 0
        %860 = vmatpush1.bf16.msra.mxu0 0
        %861 = vmatprep.subr.bf16.mxu0 0
        %862 = vmatpush1.bf16.msra.mxu0 0
        %863 = vmatprep.subr.bf16.mxu0 0
        %864 = vmatpush1.bf16.msra.mxu0 0
        %865 = vmatprep.subr.bf16.mxu0 0
        %866 = vmatpush1.bf16.msra.mxu0 0
        %867 = vmatprep.subr.bf16.mxu0 0
        %868 = vmatpush1.bf16.msra.mxu0 0
        %869 = vmatprep.subr.bf16.mxu0 0
        %870 = vmatpush1.bf16.msra.mxu0 0
        %871 = vmatprep.subr.bf16.mxu0 0
        %872 = vmatpush1.bf16.msra.mxu0 0
        %873 = vmatprep.subr.bf16.mxu0 0
        %874 = vmatpush1.bf16.msra.mxu0 0
        %875 = vmatprep.mubr.bf16.mxu0 0
        %876 = vmatmul.mubr.bf16.gmra.mrb[0].mxu0 %v841
        %v877 = vpop.f32.mrb[0].mxu0
        %v878 = vadd.f32 0.0, %v877
        %v879 = vpop.f32.mrb[0].mxu0
        %v880 = vpop.f32.mrb[0].mxu0
        %v881 = vadd.f32 0.0, %v880
        %v882 = vpop.f32.mrb[0].mxu0
        %883 = vdwg.mxu0
        %v884 = vpack.c.bf16 %v881, %v878
        %886 = vrot.lane.b32.xlu0 %v884, 64
        %v887 = vpop.permute.xlu0 %886
        %vm889 = vcmask 1048064
        %890 = vst.msk [vmem:[#allocation2] sm:$0xff] %vm889, %v887
        %v891 = vld [vmem:[#allocation2] sm:$0xff]
        %v892 = vld [vmem:[#allocation8] sm:$0xf]
        %v893 = vld [vmem:[#allocation8 + $0x4] sm:$0xf]
        %v894 = vld [vmem:[#allocation8 + $0x8] sm:$0xf]
        %v895 = vld [vmem:[#allocation8 + $0xc] sm:$0xf]
        %v896 = vld [vmem:[#allocation8 + $0x10] sm:$0xf]
        %v897 = vld [vmem:[#allocation8 + $0x14] sm:$0xf]
        %v898 = vld [vmem:[#allocation8 + $0x18] sm:$0xf]
        %v899 = vld [vmem:[#allocation8 + $0x1c] sm:$0xf]
        %v900 = vld [vmem:[#allocation8 + $0x20] sm:$0xf]
        %v901 = vld [vmem:[#allocation8 + $0x24] sm:$0xf]
        %v902 = vld [vmem:[#allocation8 + $0x28] sm:$0xf]
        %v903 = vld [vmem:[#allocation8 + $0x2c] sm:$0xf]
        %v904 = vld [vmem:[#allocation8 + $0x30] sm:$0xf]
        %v905 = vld [vmem:[#allocation8 + $0x34] sm:$0xf]
        %v906 = vld [vmem:[#allocation8 + $0x38] sm:$0xf]
        %v907 = vld [vmem:[#allocation8 + $0x3c] sm:$0xf]
        %v908 = vld [vmem:[%s5] sm:$0x1]
        %v910 = vlaneseq
        %v911 = vshrl.u32 %v910, 7
        %v912 = vsub.s32 0, %v911
        %v913 = vrot.slane %v908, %v912
        %v931 = vunpack.c.l.b16 %v892
        %v932 = vunpack.c.l.b16 %v893
        %v933 = vunpack.c.l.b16 %v894
        %v934 = vunpack.c.l.b16 %v895
        %v935 = vunpack.c.l.b16 %v896
        %v936 = vunpack.c.l.b16 %v897
        %v937 = vunpack.c.l.b16 %v898
        %v938 = vunpack.c.l.b16 %v899
        %v939 = vunpack.c.l.b16 %v900
        %v940 = vunpack.c.l.b16 %v901
        %v941 = vunpack.c.l.b16 %v902
        %v942 = vunpack.c.l.b16 %v903
        %v943 = vunpack.c.l.b16 %v904
        %v944 = vunpack.c.l.b16 %v905
        %v945 = vunpack.c.l.b16 %v906
        %v946 = vunpack.c.l.b16 %v907
        %v947 = vpack.c.b16 %v932, %v931
        %v948 = vpack.c.b16 %v934, %v933
        %v949 = vpack.c.b16 %v936, %v935
        %v950 = vpack.c.b16 %v938, %v937
        %v951 = vpack.c.b16 %v940, %v939
        %v952 = vpack.c.b16 %v942, %v941
        %v953 = vpack.c.b16 %v944, %v943
        %v954 = vpack.c.b16 %v946, %v945
        %963 = vmatprep.subr.bf16.mxu0 0
        %964 = vmatpush1.bf16.msra.mxu0 %v947
        %965 = vmatprep.subr.bf16.mxu0 0
        %966 = vmatpush1.bf16.msra.mxu0 %v948
        %967 = vmatprep.subr.bf16.mxu0 0
        %968 = vmatpush1.bf16.msra.mxu0 %v949
        %969 = vmatprep.subr.bf16.mxu0 0
        %970 = vmatpush1.bf16.msra.mxu0 %v950
        %971 = vmatprep.subr.bf16.mxu0 0
        %972 = vmatpush1.bf16.msra.mxu0 %v951
        %973 = vmatprep.subr.bf16.mxu0 0
        %974 = vmatpush1.bf16.msra.mxu0 %v952
        %975 = vmatprep.subr.bf16.mxu0 0
        %976 = vmatpush1.bf16.msra.mxu0 %v953
        %977 = vmatprep.subr.bf16.mxu0 0
        %978 = vmatpush1.bf16.msra.mxu0 %v954
        %979 = vmatprep.subr.bf16.mxu0 0
        %980 = vmatpush1.bf16.msra.mxu0 0
        %981 = vmatprep.subr.bf16.mxu0 0
        %982 = vmatpush1.bf16.msra.mxu0 0
        %983 = vmatprep.subr.bf16.mxu0 0
        %984 = vmatpush1.bf16.msra.mxu0 0
        %985 = vmatprep.subr.bf16.mxu0 0
        %986 = vmatpush1.bf16.msra.mxu0 0
        %987 = vmatprep.subr.bf16.mxu0 0
        %988 = vmatpush1.bf16.msra.mxu0 0
        %989 = vmatprep.subr.bf16.mxu0 0
        %990 = vmatpush1.bf16.msra.mxu0 0
        %991 = vmatprep.subr.bf16.mxu0 0
        %992 = vmatpush1.bf16.msra.mxu0 0
        %993 = vmatprep.subr.bf16.mxu0 0
        %994 = vmatpush1.bf16.msra.mxu0 0
        %995 = vmatprep.mubr.bf16.mxu0 0
        %996 = vmatmul.mubr.bf16.gmra.mrb[0].mxu0 %v891
        %v997 = vpop.f32.mrb[0].mxu0
        %v998 = vadd.f32 %v913, %v997
        %v999 = vpop.f32.mrb[0].mxu0
        %v1000 = vpop.f32.mrb[0].mxu0
        %v1001 = vadd.f32 %v913, %v1000
        %v1002 = vpop.f32.mrb[0].mxu0
        %1003 = vdwg.mxu0
        %v1004 = vadd.f32 %v998, %v368
        %v1005 = vadd.f32 %v1001, %v369
        %1006 = vadd.xlane.f32.xlu0 %v1004
        %v1007 = vpop.xlane.xlu0 %1006
        %1008 = vadd.xlane.f32.xlu0 %v1005
        %v1009 = vpop.xlane.xlu0 %1008
        %v1010 = vrcp.pop 128.0
        %v1011 = vmul.f32 %v1007, %v1010
        %v1012 = vmul.f32 %v1009, %v1010
        %v1013 = vsub.f32 %v1004, %v1011
        %v1014 = vsub.f32 %v1005, %v1012
        %v1015 = vmul.f32 %v1013, %v1013
        %v1016 = vmul.f32 %v1014, %v1014
        %1017 = vadd.xlane.f32.xlu0 %v1015
        %v1018 = vpop.xlane.xlu0 %1017
        %1019 = vadd.xlane.f32.xlu0 %v1016
        %v1020 = vpop.xlane.xlu0 %1019
        %v1021 = vmul.f32 %v1018, %v1010
        %v1022 = vmul.f32 %v1020, %v1010
        %v1023 = vadd.f32 %v1021, 1e-12
        %v1024 = vadd.f32 %v1022, 1e-12
        %v1025 = vrsqrt.pop %v1023
        %v1026 = vrsqrt.pop %v1024
        %v1027 = vmul.f32 %v1013, %v1025
        %v1028 = vmul.f32 %v1014, %v1026
        %v1029 = vld [vmem:[%s6] sm:$0x1]
        %v1031 = vlaneseq
        %v1032 = vshrl.u32 %v1031, 7
        %v1033 = vsub.s32 0, %v1032
        %v1034 = vrot.slane %v1029, %v1033
        %v1036 = vmul.f32 %v1027, %v1034
        %v1037 = vmul.f32 %v1028, %v1034
        %v1038 = vld [vmem:[%s7] sm:$0x1]
        %v1040 = vlaneseq
        %v1041 = vshrl.u32 %v1040, 7
        %v1042 = vsub.s32 0, %v1041
        %v1043 = vrot.slane %v1038, %v1042
        %v1045 = vadd.f32 %v1036, %v1043
        %v1046 = vadd.f32 %v1037, %v1043
        %v1047 = vpack.c.bf16 %v1046, %v1045
        %v1049 = vunpack.c.l.b16 %v1047
        %v1050 = vunpack.c.h.b16 %v1047
        %v1051 = vpack.c.b16 %v1049, %v1049
        %v1052 = vpack.c.b16 %v1050, %v1050
        %1055 = vst [vmem:[%s363] sm:$0xf] %v1051
        %1056 = vst [vmem:[%s363 + $0x4] sm:$0xf] %v1052
        %s1057 = sand.u32 %s212, 1
        %s1058 = scalar_lea.sflag [#allocation5], %s1057
        %s1059 = sand.u32 %s212, 1
        %s1060 = smul.addr %s1059, 8
        %s1061 = scalar_lea.vmem [#allocation9], %s1060
        // Predicated region
        $region65: #{tpu_custom_call.1} parent=51 // pred_check
          %p1062 = pneg %p222
        $region66: #{tpu_custom_call.1} parent=51 // pred_check_branch
          %1064 = sbr.rel (%p1062) target = $region68
        $region67: #{tpu_custom_call.1} parent=51 // pred_region
          %s1066 = ssub.s32 128, 128
          %1067 = vsyncadd %s1058, %s1066
          %s1068 = smul.addr %s26, 2
          %s1069 = smul.addr %s1068, 64
          %s1070 = scalar_lea.hbm %s8, %s1069
          %s1071 = sshll.u32 %s1061, 4
          %s1072 = int_to_ptr.vmem [resolvable:$true] %s1071
          %1077 = dma.vmem_to_hbm [thread:$0]  %s1072, 128, %s1070, %s1058, 64, 64, 4
        $region68: #{tpu_custom_call.1} parent=51 // pred_fallthru
          _
      $region52: #{tpu_custom_call.1} parent=5 // pred_fallthru
        _
      %p1078 = scmp.le.s32.totalorder 2, %s21
      // Predicated region
      $region69: #{tpu_custom_call.1} parent=5 // pred_check
        %p1079 = pneg %p1078
      $region70: #{tpu_custom_call.1} parent=5 // pred_check_branch
        %1081 = sbr.rel (%p1079) target = $region72
      $region71: #{tpu_custom_call.1} parent=5 // pred_region
        %s1082 = ssub.s32 %s21, 2
        // Predicated region
        $region73: #{tpu_custom_call.1} parent=71 // pred_check
          %p1083 = pneg %p228
        $region74: #{tpu_custom_call.1} parent=71 // pred_check_branch
          %1085 = sbr.rel (%p1083) target = $region76
        $region75: #{tpu_custom_call.1} parent=71 // pred_region
          %s1086 = sand.u32 %s213, 1
          %s1087 = scalar_lea.sflag [#allocation5], %s1086
          %s1088 = sand.u32 %s213, 1
          %s1089 = smul.addr %s1088, 8
          %s1090 = scalar_lea.vmem [#allocation9], %s1089
          %1091 = dma.done %s1087, 128
        $region76: #{tpu_custom_call.1} parent=71 // pred_fallthru
          _
      $region72: #{tpu_custom_call.1} parent=5 // pred_fallthru
        _
    $region6: #{tpu_custom_call.1} parent=1 // loop_footer
      %s25 = sadd.s32 1, %s21
    $region7: #{tpu_custom_call.1} parent=1 // loop_footer_branch
      %20 = sbr.rel target = $region3
    $region8: #{tpu_custom_call.1} parent=1 // loop_exit
      _
    %1092 = vsyncpa [#allocation4], 1
    %s1093 = scalar_lea.sflag [#allocation4], 1
    %1094 = vsyncpa %s1093, 1
    %1095 = vsyncpa [#allocation7], 1
    %1096 = vsyncpa [#allocation5], 1
    %s1097 = scalar_lea.sflag [#allocation5], 1
    %1098 = vsyncpa %s1097, 1

</llo_original>
